<compile_context>
chip_gen: v7x
topology: tpu7x:2x2x1
jax: 0.10.0
libtpu: 0.0.40
codegen_flags: <defaults>
</compile_context>

<pallas_src>
import functools

import jax
import jax.numpy as jnp
from jax.experimental import pallas as pl
from jax.experimental.pallas import tpu as pltpu


def _rmsnorm_kernel(x_ref, w_ref, o_ref, *, inv_dim):
    # x_ref: (tm, D) input tile, w_ref: (1, D) f32 weight (resident across steps),
    # o_ref: (tm, D) output tile.
    xf = x_ref[...].astype(jnp.float32)
    # sum(x^2) * (1/D) feeding an EUP rsqrt. No eps, per the PyTorch module.
    sum_sq = jnp.sum(xf * xf, axis=-1, keepdims=True)
    inv_rms = jax.lax.rsqrt(sum_sq * inv_dim)
    # f32 scale everywhere; downcast only at the store (at worst neutral on v6e/v7x,
    # avoids bf16 pack/unpack legalization on v5e).
    o_ref[...] = (xf * inv_rms * w_ref[...]).astype(o_ref.dtype)


def _vmem_capacity_bytes():
    try:
        info = pltpu.get_tpu_info()
        cap = getattr(info, "vmem_capacity_bytes", None)
        if cap:
            return int(cap)
    except Exception:
        pass
    return 64 * 1024 * 1024  # conservative default (v7x-sized)


def rmsnorm(x, weight, *, block_rows=None):
    """x: (..., dim) float array; weight: (dim,). Returns x / rms(x) * weight."""
    orig_shape = x.shape
    dim = orig_shape[-1]
    x2d = x.reshape(-1, dim)
    rows = x2d.shape[0]

    itemsize = jnp.dtype(x.dtype).itemsize
    sublane = 8 if itemsize >= 4 else 16  # sublane packing for the row dim

    # Generation-aware tile budget: v5e/v6e have 128 MiB VMEM, v7x only 64 MiB.
    vmem_cap = _vmem_capacity_bytes()
    if vmem_cap >= 100 * 1024 * 1024:      # v5e / v6e
        budget_bytes = 56 * 1024 * 1024
    else:                                   # v7x (or unknown): stay conservative
        budget_bytes = 24 * 1024 * 1024

    # Double-buffered in + out tiles; bf16 (and narrower) inputs also carry an
    # in-kernel f32 intermediate, so budget with a larger factor.
    factor = 4 if itemsize >= 4 else 6
    per_row_bytes = dim * itemsize

    if block_rows is None:
        max_rows_by_vmem = max(sublane, budget_bytes // (factor * per_row_bytes))
        block_rows = min(1024, max_rows_by_vmem)
        # Keep >= ~4 grid steps when there is enough work: both v7x TensorCores
        # get rows and the DMA pipeline has something to overlap.
        if rows >= 4 * sublane:
            block_rows = min(block_rows, max(sublane, (rows // 4 // sublane) * sublane))
        # Never make the block taller than the (sublane-rounded) row count.
        block_rows = min(block_rows, ((rows + sublane - 1) // sublane) * sublane)
        block_rows = max(sublane, (block_rows // sublane) * sublane)

    # Ragged last block handled by Pallas (masked stores); no wrapper pad / slice,
    # no extra HBM passes.  Full hidden dim as the block width -> no lane padding.
    grid = (pl.cdiv(rows, block_rows),)

    # Weight pre-cast to f32 once; stays VMEM-resident via the constant (0,0) map.
    w2d = weight.astype(jnp.float32).reshape(1, dim)

    tile_bytes = block_rows * dim * itemsize
    vmem_limit = int(min(max(vmem_cap - 16 * 1024 * 1024, 32 * 1024 * 1024),
                         max(32 * 1024 * 1024, factor * tile_bytes + (2 << 20))))

    kernel = functools.partial(_rmsnorm_kernel, inv_dim=1.0 / float(dim))

    cost = pl.CostEstimate(
        flops=3 * rows * dim,
        transcendentals=rows,
        bytes_accessed=2 * rows * dim * itemsize + dim * 4,
    )

    out = pl.pallas_call(
        kernel,
        out_shape=jax.ShapeDtypeStruct((rows, dim), x.dtype),
        grid_spec=pltpu.PrefetchScalarGridSpec(
            num_scalar_prefetch=0,
            grid=grid,
            in_specs=[
                pl.BlockSpec((block_rows, dim), lambda i: (i, 0)),
                pl.BlockSpec((1, dim), lambda i: (0, 0)),
            ],
            out_specs=pl.BlockSpec((block_rows, dim), lambda i: (i, 0)),
        ),
        compiler_params=pltpu.CompilerParams(
            dimension_semantics=("parallel",),  # lets v7x shard rows across its 2 TCs
            vmem_limit_bytes=vmem_limit,
        ),
        cost_estimate=cost,
    )(x2d, w2d)

    return out.reshape(orig_shape)


if __name__ == "__main__":
    key = jax.random.PRNGKey(0)
    batch, seq, hidden = 2, 8, 32
    x = jax.random.normal(key, (batch, seq, hidden), dtype=jnp.float32)
    # Deterministic parameter init: nn.Parameter(torch.ones(dim))
    weight = jnp.ones((hidden,), dtype=jnp.float32)

    out = rmsnorm(x, weight)
    out = jax.block_until_ready(out)

    # Pure-JAX reference (matches the PyTorch forward: x / sqrt(mean(x^2)) * w)
    var = jnp.mean(x * x, axis=-1, keepdims=True)
    ref = x / jnp.sqrt(var) * weight
    assert jnp.allclose(out, ref, atol=1e-5, rtol=1e-5), "mismatch vs reference"

    # NOTE: like the PyTorch module, there is no eps -> an all-zero row yields inf/NaN.
    print("KERNEL_OK")
</pallas_src>

<mosaic_0001>
module attributes {stable_mosaic.version = 11 : i64} {
  func.func @_rmsnorm_kernel(%arg0: i32, %arg1: memref<16x32xf32, #tpu.memory_space<vmem>>, %arg2: memref<1x32xf32, #tpu.memory_space<vmem>>, %arg3: memref<16x32xf32, #tpu.memory_space<vmem>>) attributes {dimension_semantics = [#tpu.dimension_semantics<parallel>], iteration_bounds = array<i64: 1>, scalar_prefetch = 0 : i64, scratch_operands = 0 : i64, tpu.core_type = #tpu.core_type<tc>, window_params = [{transform_indices = @transform_0, window_bounds = array<i64: 16, 32>}, {pipeline_mode = #tpu.pipeline_mode<synchronous>, transform_indices = @transform_1, window_bounds = array<i64: 1, 32>}, {transform_indices = @transform_2, window_bounds = array<i64: 16, 32>}]} {
    %c0 = arith.constant 0 : index
    %c0_0 = arith.constant 0 : index
    %0 = vector.load %arg1[%c0, %c0_0] : memref<16x32xf32, #tpu.memory_space<vmem>>, vector<16x32xf32>
    %1 = arith.mulf %0, %0 : vector<16x32xf32>
    %cst = arith.constant dense<0.000000e+00> : vector<16xf32>
    %2 = vector.multi_reduction <add>, %1, %cst [1] : vector<16x32xf32> to vector<16xf32>
    %3 = vector.shape_cast %2 : vector<16xf32> to vector<16x1xf32>
    %cst_1 = arith.constant 3.125000e-02 : f32
    %4 = vector.broadcast %cst_1 : f32 to vector<16x1xf32>
    %5 = arith.mulf %3, %4 : vector<16x1xf32>
    %6 = math.rsqrt %5 : vector<16x1xf32>
    %7 = vector.broadcast %6 : vector<16x1xf32> to vector<16x32xf32>
    %8 = arith.mulf %0, %7 : vector<16x32xf32>
    %c0_2 = arith.constant 0 : index
    %c0_3 = arith.constant 0 : index
    %9 = vector.load %arg2[%c0_2, %c0_3] : memref<1x32xf32, #tpu.memory_space<vmem>>, vector<1x32xf32>
    %10 = vector.broadcast %9 : vector<1x32xf32> to vector<16x32xf32>
    %11 = arith.mulf %8, %10 : vector<16x32xf32>
    %c0_4 = arith.constant 0 : index
    %c0_5 = arith.constant 0 : index
    %12 = vector.load %arg3[%c0_4, %c0_5] : memref<16x32xf32, #tpu.memory_space<vmem>>, vector<16x32xf32>
    tpu.vector_store %arg3[%c0_4, %c0_5], %11 {strides = array<i32>} : memref<16x32xf32, #tpu.memory_space<vmem>>, vector<16x32xf32>,
    return
  }
  func.func @transform_0(%arg0: i32) -> (i32, i32) {
    %c0_i32 = arith.constant 0 : i32
    %c0_i32_0 = arith.constant 0 : i32
    return %arg0, %c0_i32 : i32, i32
  }
  func.func @transform_1(%arg0: i32) -> (i32, i32) {
    %c0_i32 = arith.constant 0 : i32
    %c0_i32_0 = arith.constant 0 : i32
    %c0_i32_1 = arith.constant 0 : i32
    return %c0_i32, %c0_i32_0 : i32, i32
  }
  func.func @transform_2(%arg0: i32) -> (i32, i32) {
    %c0_i32 = arith.constant 0 : i32
    %c0_i32_0 = arith.constant 0 : i32
    return %arg0, %c0_i32 : i32, i32
  }
}

</mosaic_0001>

<llo_original>
// kernel: tpu_custom_call.1
$region0: #{tpu_custom_call.1}
  #allocation0 [shape = 'u32[]', space=smem, size = 0x4, offset = 0x4, fixed_abs, tag = 'smem constant byte address 0x4 - core index']
  #allocation1 [shape = 'u32[144,128]{1,0:T(1,128)}', space=vmem, size = 0x12000, scoped, tag = 'internal scratch']
  %s0 = inlined_call_operand.hbm [shape: f32[16,32], index: 0, kind: input, shape index: {}]
  %s1 = inlined_call_operand.vmem [shape: f32[1,32], index: 1, kind: input, shape index: {}]
  %s2 = inlined_call_operand.hbm [shape: f32[16,32], index: 2, kind: output, shape index: {}]
  %s3 = sld [smem:[#allocation0]]
  $region22: #{tpu_custom_call.1} parent=0
    _
  %s5 = ssub.s32 1, %s3
  %s6 = scalar_select 0, %s5, %s3
  $region1: #{tpu_custom_call.1} parent=0
    #allocation2 [shape = 'u8[8192]{0}', space=vmem, size = 0x2000, scoped, tag = 'input window, operand 0, single buffered']
    #allocation3 [shape = 's32[1]{0}', space=sflag, size = 0x4, scoped, tag = 'scoped memory for tpu_custom_call.1']
    #allocation4 [shape = 's32[1]{0}', space=sflag, size = 0x4, scoped, tag = 'scoped memory for tpu_custom_call.1']
    #allocation5 [shape = 'u8[8192]{0}', space=vmem, size = 0x2000, scoped, tag = 'output window, operand 0, single buffered']
    %7 = vsyncpa [#allocation3], 0
    %8 = vsyncpa [#allocation4], 0
    // Predicated region
    $region2: #{tpu_custom_call.1} parent=1 // pred_check
      _
    $region3: #{tpu_custom_call.1} parent=1 // pred_check_branch
      %10 = sbr.rel (0) target = $region5
    $region4: #{tpu_custom_call.1} parent=1 // pred_region
      %s12 = ssub.s32 256, 256
      %13 = vsyncadd [#allocation3], %s12
      %s14 = sshll.u32 [#allocation2], 4
      %s15 = int_to_ptr.vmem [resolvable:$true] %s14
      %20 = dma.hbm_to_vmem [thread:$0]  %s0, 256, %s15, [#allocation3], 128, 128, 8
    $region5: #{tpu_custom_call.1} parent=1 // pred_fallthru
      _
    // Predicated region
    $region6: #{tpu_custom_call.1} parent=1 // pred_check
      _
    $region7: #{tpu_custom_call.1} parent=1 // pred_check_branch
      %22 = sbr.rel (0) target = $region9
    $region8: #{tpu_custom_call.1} parent=1 // pred_region
      _
    $region9: #{tpu_custom_call.1} parent=1 // pred_fallthru
      _
    // Predicated region
    $region10: #{tpu_custom_call.1} parent=1 // pred_check
      _
    $region11: #{tpu_custom_call.1} parent=1 // pred_check_branch
      %24 = sbr.rel (0) target = $region13
    $region12: #{tpu_custom_call.1} parent=1 // pred_region
      %25 = dma.done [#allocation3], 256
    $region13: #{tpu_custom_call.1} parent=1 // pred_fallthru
      _
    %v26 = vld [vmem:[#allocation2] sm:$0xff]
    %v27 = vld [vmem:[#allocation2 + $0x8] sm:$0xff]
    %v28 = vmul.f32 %v26, %v26
    %v29 = vmul.f32 %v27, %v27
    %vm30 = vcmask 261120
    %v31 = vsel %vm30, %v28, 0.0
    %32 = vadd.xlane.f32.xlu0 %v31
    %v33 = vpop.xlane.xlu0 %32
    %v34 = vsel %vm30, %v29, 0.0
    %35 = vadd.xlane.f32.xlu0 %v34
    %v36 = vpop.xlane.xlu0 %35
    %v37 = vmul.f32 %v33, 0.03125
    %v38 = vmul.f32 %v36, 0.03125
    %v39 = vrsqrt.pop %v37
    %v40 = vrsqrt.pop %v38
    %v41 = vmul.f32 %v26, %v39
    %v42 = vmul.f32 %v27, %v40
    %v43 = vld [vmem:[%s1] sm:$0x1]
    %v45 = vlaneseq
    %v46 = vshrl.u32 %v45, 7
    %v47 = vsub.s32 0, %v46
    %v48 = vrot.slane %v43, %v47
    %v50 = vmul.f32 %v41, %v48
    %v51 = vmul.f32 %v42, %v48
    %52 = vst.msk [vmem:[#allocation5] sm:$0xff] %vm30, %v50
    %53 = vst.msk [vmem:[#allocation5 + $0x8] sm:$0xff] %vm30, %v51
    // Predicated region
    $region14: #{tpu_custom_call.1} parent=1 // pred_check
      _
    $region15: #{tpu_custom_call.1} parent=1 // pred_check_branch
      %55 = sbr.rel (0) target = $region17
    $region16: #{tpu_custom_call.1} parent=1 // pred_region
      %s57 = ssub.s32 256, 256
      %58 = vsyncadd [#allocation4], %s57
      %s59 = sshll.u32 [#allocation5], 4
      %s60 = int_to_ptr.vmem [resolvable:$true] %s59
      %65 = dma.vmem_to_hbm [thread:$0]  %s60, 256, %s2, [#allocation4], 128, 128, 8
    $region17: #{tpu_custom_call.1} parent=1 // pred_fallthru
      _
    // Predicated region
    $region18: #{tpu_custom_call.1} parent=1 // pred_check
      _
    $region19: #{tpu_custom_call.1} parent=1 // pred_check_branch
      %67 = sbr.rel (0) target = $region21
    $region20: #{tpu_custom_call.1} parent=1 // pred_region
      %68 = dma.done [#allocation4], 256
    $region21: #{tpu_custom_call.1} parent=1 // pred_fallthru
      _
    %69 = vsyncpa [#allocation3], 1
    %70 = vsyncpa [#allocation4], 1

</llo_original>
